<compile_context>
chip_gen: v7x
topology: tpu7x:2x2x1
jax: 0.10.0
libtpu: 0.0.40
codegen_flags: <defaults>
</compile_context>

<pallas_src>
import jax
import jax.numpy as jnp
from jax import lax
from jax.experimental import pallas as pl
from jax.experimental.pallas import tpu as pltpu


def _round_up(n, m):
    return (n + m - 1) // m * m


def _vmem_capacity_bytes():
    try:
        return int(pltpu.get_tpu_info().vmem_capacity_bytes)
    except Exception:
        return 64 << 20  # conservative (v7x-class) fallback


def _mlp_kernel(x_ref, w1_ref, b1_ref, w2_ref, b2_ref, w3_ref, b3_ref, o_ref):
    # layer 1: MXU matmul (f32 accumulation) + bias + ReLU on the VPU
    h1 = jnp.dot(x_ref[...], w1_ref[...], preferred_element_type=jnp.float32)
    h1 = jnp.maximum(h1 + b1_ref[...], 0.0)

    # layer 2: MXU matmul into the 128-padded hidden (full-lane tile)
    h2 = jnp.dot(h1.astype(w2_ref.dtype), w2_ref[...],
                 preferred_element_type=jnp.float32)
    h2 = jnp.maximum(h2 + b2_ref[...], 0.0)

    # layer 3 (128-padded 64 -> 1): contract h2's last dim against the w3 row.
    # Produces the (1, tile_m) lane-dense output row directly (a couple of MXU
    # pushes + full-tile transposes) instead of a cross-lane log-tree reduce.
    out_row = lax.dot_general(
        w3_ref[...], h2,
        dimension_numbers=(((1,), (1,)), ((), ())),
        preferred_element_type=jnp.float32)               # (1, tile_m)
    o_ref[...] = (out_row + b3_ref[0, 0]).astype(o_ref.dtype)


def surface_model_forward(x, params, *, tile_m=None, compute_dtype=jnp.bfloat16):
    """x: (B, input_dim). params: dict w1,b1,w2,b2,w3,b3 (weights stored (in,out)).

    Matmul operands in compute_dtype (bf16 default on all TPU generations);
    biases, ReLU and accumulation stay f32.
    """
    B, D = x.shape
    w1, b1 = params["w1"], params["b1"]   # (D, 256), (1, 256)
    w2, b2 = params["w2"], params["b2"]   # (256, 64), (1, 64)
    w3, b3 = params["w3"], params["b3"]   # (64, 1),  (1, 1)
    H1 = w1.shape[1]
    H2 = w2.shape[1]
    itemsize = jnp.dtype(compute_dtype).itemsize

    # ---- exact zero-padding --------------------------------------------------
    # hidden-2: pad 64 -> 128 full lanes (padded b2/w3 are zero, ReLU(0)=0).
    H2p = _round_up(max(H2, 128), 128)
    if H2p != H2:
        w2 = jnp.pad(w2, ((0, 0), (0, H2p - H2)))
        b2 = jnp.pad(b2, ((0, 0), (0, H2p - H2)))
        w3 = jnp.pad(w3, ((0, H2p - H2), (0, 0)))
    # input dim: pad to the sublane pack (8 for f32, 16 for bf16) so the layer-1
    # operands get clean (non-ragged) sublane layouts. Padded K contributes zeros.
    sub_pack = 32 // (8 * itemsize) * 8            # 8 for f32, 16 for bf16
    Dp = _round_up(D, sub_pack)
    if Dp != D:
        x = jnp.pad(x, ((0, 0), (0, Dp - D)))
        w1 = jnp.pad(w1, ((0, Dp - D), (0, 0)))

    w3_row = jnp.transpose(w3).astype(jnp.float32)          # (1, H2p)
    b1 = b1.astype(jnp.float32)
    b2 = b2.astype(jnp.float32)
    b3 = jnp.asarray(b3, jnp.float32).reshape(1, 1)

    x_c = x.astype(compute_dtype)
    w1_c = w1.astype(compute_dtype)
    w2_c = w2.astype(compute_dtype)

    # ---- generation-aware VMEM budget ---------------------------------------
    vmem_cap = _vmem_capacity_bytes()
    if vmem_cap >= (100 << 20):        # v5e / v6e: 128 MiB physical VMEM
        ws_budget = 64 << 20
        vmem_limit = 96 << 20
    else:                              # v7x-class: 64 MiB physical VMEM
        ws_budget = 24 << 20
        vmem_limit = 48 << 20

    # Resident weights are still double-buffered by the pipeline even with a
    # constant index_map; count them against the working set.
    weight_bytes = 2 * ((Dp * H1 + H1 * H2p) * itemsize + (H1 + 2 * H2p) * 4)

    def working_set(tm):
        return (2 * tm * Dp * itemsize                 # double-buffered x tile
                + tm * (H1 + H2p + 2) * 4              # f32 activations + out
                + weight_bytes)

    if tile_m is None:
        tile_m = 2048                                  # big tiles amortize step cost
        while tile_m > 128 and working_set(tile_m) > ws_budget:
            tile_m //= 2
        B128 = _round_up(B, 128)
        tile_m = min(tile_m, max(128, B128))
        # v7x has 2 TensorCores; keep >= 2 grid steps for moderate batches so
        # dimension_semantics=("parallel",) can shard across both. Cheap on 1-TC.
        if B128 >= 256:
            tile_m = min(tile_m, max(128, (B128 // 2) // 128 * 128))
    assert tile_m % 128 == 0, "tile_m must be a multiple of 128"

    # Ragged-batch handling: zero-pad the batch to a multiple of tile_m.
    B_pad = _round_up(B, tile_m)
    if B_pad != B:
        x_c = jnp.pad(x_c, ((0, B_pad - B), (0, 0)))
    num_tiles = B_pad // tile_m

    cost = pl.CostEstimate(
        flops=2 * B_pad * (Dp * H1 + H1 * H2p + H2p),
        transcendentals=0,
        bytes_accessed=(B_pad * Dp * itemsize                  # x stream
                        + (Dp * H1 + H1 * H2p) * itemsize      # w1, w2
                        + (H1 + 2 * H2p + 1) * 4               # biases + w3 row
                        + B_pad * 4),                          # output
    )

    out = pl.pallas_call(
        _mlp_kernel,
        out_shape=jax.ShapeDtypeStruct((1, B_pad), jnp.float32),
        grid=(num_tiles,),
        in_specs=[
            pl.BlockSpec((tile_m, Dp), lambda i: (i, 0)),         # x tile
            pl.BlockSpec((Dp, H1),     lambda i: (0, 0)),         # w1 (resident)
            pl.BlockSpec((1, H1),      lambda i: (0, 0)),         # b1
            pl.BlockSpec((H1, H2p),    lambda i: (0, 0)),         # w2 (padded)
            pl.BlockSpec((1, H2p),     lambda i: (0, 0)),         # b2 (padded)
            pl.BlockSpec((1, H2p),     lambda i: (0, 0)),         # w3 as a row
            pl.BlockSpec(memory_space=pltpu.MemorySpace.SMEM),    # b3 scalar
        ],
        out_specs=pl.BlockSpec((1, tile_m), lambda i: (0, i)),    # lane-dense
        compiler_params=pltpu.CompilerParams(
            dimension_semantics=("parallel",),
            vmem_limit_bytes=vmem_limit,
        ),
        cost_estimate=cost,
    )(x_c, w1_c, b1, w2_c, b2, w3_row, b3)

    # (1, B_pad) lane-dense slab -> (B, 1); wrapper-side reshape is free plumbing.
    return out.reshape(B_pad, 1)[:B]


def init_params(input_dim, key):
    """Deterministic init mimicking PyTorch Linear default (uniform +/- 1/sqrt(fan_in))."""
    ks = jax.random.split(key, 6)

    def lin(kw, kb, fan_in, fan_out):
        bound = 1.0 / jnp.sqrt(fan_in)
        # stored as (in, out) so the kernel computes x @ W
        w = jax.random.uniform(kw, (fan_in, fan_out), jnp.float32, -bound, bound)
        b = jax.random.uniform(kb, (1, fan_out), jnp.float32, -bound, bound)
        return w, b

    w1, b1 = lin(ks[0], ks[1], input_dim, 256)
    w2, b2 = lin(ks[2], ks[3], 256, 64)
    w3, b3 = lin(ks[4], ks[5], 64, 1)
    return dict(w1=w1, b1=b1, w2=w2, b2=b2, w3=w3, b3=b3)


def reference_forward(x, p, compute_dtype=jnp.float32):
    cd = compute_dtype
    h1 = jnp.maximum(
        jnp.dot(x.astype(cd), p["w1"].astype(cd),
                preferred_element_type=jnp.float32) + p["b1"], 0.0)
    h2 = jnp.maximum(
        jnp.dot(h1.astype(cd), p["w2"].astype(cd),
                preferred_element_type=jnp.float32) + p["b2"], 0.0)
    return jnp.dot(h2, p["w3"]) + p["b3"]


if __name__ == "__main__":
    key = jax.random.PRNGKey(0)
    k_x, k_p = jax.random.split(key)

    batch, input_dim = 8, 32
    x = jax.random.normal(k_x, (batch, input_dim), jnp.float32)
    params = init_params(input_dim, k_p)

    # default path: bf16 matmul operands, f32 accumulation; compare vs a
    # matching bf16 reference
    out_bf16 = jax.block_until_ready(surface_model_forward(x, params))
    ref_bf16 = reference_forward(x, params, compute_dtype=jnp.bfloat16)
    assert out_bf16.shape == (batch, 1), out_bf16.shape
    assert jnp.allclose(out_bf16, ref_bf16, atol=5e-3, rtol=5e-3), "bf16 mismatch"

    # f32 path: near-exact match vs f32 reference
    out_f32 = jax.block_until_ready(
        surface_model_forward(x, params, compute_dtype=jnp.float32))
    ref_f32 = reference_forward(x, params)
    assert out_f32.shape == (batch, 1), out_f32.shape
    assert jnp.allclose(out_f32, ref_f32, atol=1e-4, rtol=1e-4), "f32 mismatch"

    print("KERNEL_OK")
</pallas_src>

<mosaic_0001>
module attributes {stable_mosaic.version = 11 : i64} {
  func.func @_mlp_kernel(%arg0: i32, %arg1: memref<128x32xbf16, #tpu.memory_space<vmem>>, %arg2: memref<32x256xbf16, #tpu.memory_space<vmem>>, %arg3: memref<1x256xf32, #tpu.memory_space<vmem>>, %arg4: memref<256x128xbf16, #tpu.memory_space<vmem>>, %arg5: memref<1x128xf32, #tpu.memory_space<vmem>>, %arg6: memref<1x128xf32, #tpu.memory_space<vmem>>, %arg7: memref<1x1xf32, #tpu.memory_space<smem>>, %arg8: memref<1x128xf32, #tpu.memory_space<vmem>>) attributes {dimension_semantics = [#tpu.dimension_semantics<parallel>], iteration_bounds = array<i64: 1>, scalar_prefetch = 0 : i64, scratch_operands = 0 : i64, tpu.core_type = #tpu.core_type<tc>, window_params = [{transform_indices = @transform_0, window_bounds = array<i64: 128, 32>}, {pipeline_mode = #tpu.pipeline_mode<synchronous>, transform_indices = @transform_1, window_bounds = array<i64: 32, 256>}, {pipeline_mode = #tpu.pipeline_mode<synchronous>, transform_indices = @transform_2, window_bounds = array<i64: 1, 256>}, {pipeline_mode = #tpu.pipeline_mode<synchronous>, transform_indices = @transform_3, window_bounds = array<i64: 256, 128>}, {pipeline_mode = #tpu.pipeline_mode<synchronous>, transform_indices = @transform_4, window_bounds = array<i64: 1, 128>}, {pipeline_mode = #tpu.pipeline_mode<synchronous>, transform_indices = @transform_5, window_bounds = array<i64: 1, 128>}, {transform_indices = @transform_6, window_bounds = array<i64: 1, 1>}, {transform_indices = @transform_7, window_bounds = array<i64: 1, 128>}]} {
    %c0 = arith.constant 0 : index
    %c0_0 = arith.constant 0 : index
    %0 = vector.load %arg1[%c0, %c0_0] : memref<128x32xbf16, #tpu.memory_space<vmem>>, vector<128x32xbf16>
    %c0_1 = arith.constant 0 : index
    %c0_2 = arith.constant 0 : index
    %1 = vector.load %arg2[%c0_1, %c0_2] : memref<32x256xbf16, #tpu.memory_space<vmem>>, vector<32x256xbf16>
    %cst = arith.constant dense<0.000000e+00> : vector<128x256xf32>
    %2 = tpu.matmul %0, %1, %cst {dimension_numbers = #tpu.dot_dimension_numbers<[1], [0], [0], [1], [0, 0, 1, 1], [], []>} : vector<128x32xbf16>, vector<32x256xbf16>, vector<128x256xf32> -> vector<128x256xf32>
    %c0_3 = arith.constant 0 : index
    %c0_4 = arith.constant 0 : index
    %3 = vector.load %arg3[%c0_3, %c0_4] : memref<1x256xf32, #tpu.memory_space<vmem>>, vector<1x256xf32>
    %4 = vector.broadcast %3 : vector<1x256xf32> to vector<128x256xf32>
    %5 = arith.addf %2, %4 : vector<128x256xf32>
    %cst_5 = arith.constant 0.000000e+00 : f32
    %6 = vector.broadcast %cst_5 : f32 to vector<128x256xf32>
    %7 = arith.maximumf %5, %6 : vector<128x256xf32>
    %8 = arith.truncf %7 : vector<128x256xf32> to vector<128x256xbf16>
    %c0_6 = arith.constant 0 : index
    %c0_7 = arith.constant 0 : index
    %9 = vector.load %arg4[%c0_6, %c0_7] : memref<256x128xbf16, #tpu.memory_space<vmem>>, vector<256x128xbf16>
    %cst_8 = arith.constant dense<0.000000e+00> : vector<128x128xf32>
    %10 = tpu.matmul %8, %9, %cst_8 {dimension_numbers = #tpu.dot_dimension_numbers<[1], [0], [0], [1], [0, 0, 1, 1], [], []>} : vector<128x256xbf16>, vector<256x128xbf16>, vector<128x128xf32> -> vector<128x128xf32>
    %c0_9 = arith.constant 0 : index
    %c0_10 = arith.constant 0 : index
    %11 = vector.load %arg5[%c0_9, %c0_10] : memref<1x128xf32, #tpu.memory_space<vmem>>, vector<1x128xf32>
    %12 = vector.broadcast %11 : vector<1x128xf32> to vector<128x128xf32>
    %13 = arith.addf %10, %12 : vector<128x128xf32>
    %cst_11 = arith.constant 0.000000e+00 : f32
    %14 = vector.broadcast %cst_11 : f32 to vector<128x128xf32>
    %15 = arith.maximumf %13, %14 : vector<128x128xf32>
    %c0_12 = arith.constant 0 : index
    %c0_13 = arith.constant 0 : index
    %16 = vector.load %arg6[%c0_12, %c0_13] : memref<1x128xf32, #tpu.memory_space<vmem>>, vector<1x128xf32>
    %cst_14 = arith.constant dense<0.000000e+00> : vector<1x128xf32>
    %17 = tpu.matmul %16, %15, %cst_14 {dimension_numbers = #tpu.dot_dimension_numbers<[1], [1], [0], [0], [0, 0, 1, 0], [], []>} : vector<1x128xf32>, vector<128x128xf32>, vector<1x128xf32> -> vector<1x128xf32>
    %c0_15 = arith.constant 0 : index
    %c0_16 = arith.constant 0 : index
    %18 = memref.load %arg7[%c0_15, %c0_16] : memref<1x1xf32, #tpu.memory_space<smem>>
    %19 = vector.broadcast %18 : f32 to vector<1x128xf32>
    %20 = arith.addf %17, %19 : vector<1x128xf32>
    %c0_17 = arith.constant 0 : index
    %c0_18 = arith.constant 0 : index
    %21 = vector.load %arg8[%c0_17, %c0_18] : memref<1x128xf32, #tpu.memory_space<vmem>>, vector<1x128xf32>
    tpu.vector_store %arg8[%c0_17, %c0_18], %20 {strides = array<i32>} : memref<1x128xf32, #tpu.memory_space<vmem>>, vector<1x128xf32>,
    return
  }
  func.func @transform_0(%arg0: i32) -> (i32, i32) {
    %c0_i32 = arith.constant 0 : i32
    %c0_i32_0 = arith.constant 0 : i32
    return %arg0, %c0_i32 : i32, i32
  }
  func.func @transform_1(%arg0: i32) -> (i32, i32) {
    %c0_i32 = arith.constant 0 : i32
    %c0_i32_0 = arith.constant 0 : i32
    %c0_i32_1 = arith.constant 0 : i32
    return %c0_i32, %c0_i32_0 : i32, i32
  }
  func.func @transform_2(%arg0: i32) -> (i32, i32) {
    %c0_i32 = arith.constant 0 : i32
    %c0_i32_0 = arith.constant 0 : i32
    %c0_i32_1 = arith.constant 0 : i32
    return %c0_i32, %c0_i32_0 : i32, i32
  }
  func.func @transform_3(%arg0: i32) -> (i32, i32) {
    %c0_i32 = arith.constant 0 : i32
    %c0_i32_0 = arith.constant 0 : i32
    %c0_i32_1 = arith.constant 0 : i32
    return %c0_i32, %c0_i32_0 : i32, i32
  }
  func.func @transform_4(%arg0: i32) -> (i32, i32) {
    %c0_i32 = arith.constant 0 : i32
    %c0_i32_0 = arith.constant 0 : i32
    %c0_i32_1 = arith.constant 0 : i32
    return %c0_i32, %c0_i32_0 : i32, i32
  }
  func.func @transform_5(%arg0: i32) -> (i32, i32) {
    %c0_i32 = arith.constant 0 : i32
    %c0_i32_0 = arith.constant 0 : i32
    %c0_i32_1 = arith.constant 0 : i32
    return %c0_i32, %c0_i32_0 : i32, i32
  }
  func.func @transform_6(%arg0: i32) -> (i32, i32) {
    %c0_i32 = arith.constant 0 : i32
    %c0_i32_0 = arith.constant 0 : i32
    %c0_i32_1 = arith.constant 0 : i32
    return %c0_i32, %c0_i32_0 : i32, i32
  }
  func.func @transform_7(%arg0: i32) -> (i32, i32) {
    %c0_i32 = arith.constant 0 : i32
    %c0_i32_0 = arith.constant 0 : i32
    return %c0_i32, %arg0 : i32, i32
  }
}

</mosaic_0001>

<llo_original>
// kernel: tpu_custom_call.1
$region0: #{tpu_custom_call.1}
  #allocation0 [shape = 'u32[]', space=smem, size = 0x4, offset = 0x4, fixed_abs, tag = 'smem constant byte address 0x4 - core index']
  #allocation1 [shape = 'u32[144,128]{1,0:T(1,128)}', space=vmem, size = 0x12000, scoped, tag = 'internal scratch']
  #allocation2 [shape = 'f32[1,1]{1,0:T(1,128)S(6)}', space=smem, size = 0x200, scoped, tag = 'scoped memory for tpu_custom_call.1']
  %s0 = inlined_call_operand.vmem [shape: bf16[128,32], index: 0, kind: input, shape index: {}]
  %s1 = inlined_call_operand.vmem [shape: bf16[32,256], index: 1, kind: input, shape index: {}]
  %s2 = inlined_call_operand.vmem [shape: f32[1,256], index: 2, kind: input, shape index: {}]
  %s3 = inlined_call_operand.hbm [shape: bf16[256,128], index: 3, kind: input, shape index: {}]
  %s4 = inlined_call_operand.vmem [shape: f32[1,128], index: 4, kind: input, shape index: {}]
  %s5 = inlined_call_operand.vmem [shape: f32[1,128], index: 5, kind: input, shape index: {}]
  %s6 = inlined_call_operand.<no memory space> [shape: f32[1,1], index: 6, kind: input, shape index: {}]
  %s7 = inlined_call_operand.hbm [shape: f32[1,128], index: 7, kind: output, shape index: {}]
  %s8 = sld [smem:[#allocation0]]
  $region42: #{tpu_custom_call.1} parent=0
    _
  %s10 = ssub.s32 1, %s8
  %s11 = scalar_select 0, %s10, %s8
  %12 = sst [smem:[#allocation2]] %s6
  $region1: #{tpu_custom_call.1} parent=0
    #allocation3 [shape = 'u8[65536]{0}', space=vmem, size = 0x10000, scoped, tag = 'input window, operand 3, single buffered']
    #allocation4 [shape = 's32[1]{0}', space=sflag, size = 0x4, scoped, tag = 'scoped memory for tpu_custom_call.1']
    #allocation5 [shape = 's32[1]{0}', space=sflag, size = 0x4, scoped, tag = 'scoped memory for tpu_custom_call.1']
    #allocation6 [shape = 'u8[512]{0}', space=vmem, size = 0x400, scoped, tag = 'output window, operand 0, single buffered']
    %13 = vsyncpa [#allocation4], 0
    %14 = vsyncpa [#allocation5], 0
    // Predicated region
    $region2: #{tpu_custom_call.1} parent=1 // pred_check
      _
    $region3: #{tpu_custom_call.1} parent=1 // pred_check_branch
      %16 = sbr.rel (0) target = $region5
    $region4: #{tpu_custom_call.1} parent=1 // pred_region
      _
    $region5: #{tpu_custom_call.1} parent=1 // pred_fallthru
      _
    // Predicated region
    $region6: #{tpu_custom_call.1} parent=1 // pred_check
      _
    $region7: #{tpu_custom_call.1} parent=1 // pred_check_branch
      %18 = sbr.rel (0) target = $region9
    $region8: #{tpu_custom_call.1} parent=1 // pred_region
      _
    $region9: #{tpu_custom_call.1} parent=1 // pred_fallthru
      _
    // Predicated region
    $region10: #{tpu_custom_call.1} parent=1 // pred_check
      _
    $region11: #{tpu_custom_call.1} parent=1 // pred_check_branch
      %20 = sbr.rel (0) target = $region13
    $region12: #{tpu_custom_call.1} parent=1 // pred_region
      _
    $region13: #{tpu_custom_call.1} parent=1 // pred_fallthru
      _
    // Predicated region
    $region14: #{tpu_custom_call.1} parent=1 // pred_check
      _
    $region15: #{tpu_custom_call.1} parent=1 // pred_check_branch
      %22 = sbr.rel (0) target = $region17
    $region16: #{tpu_custom_call.1} parent=1 // pred_region
      %s24 = ssub.s32 2048, 2048
      %25 = vsyncadd [#allocation4], %s24
      %s26 = sshll.u32 [#allocation3], 4
      %s27 = int_to_ptr.vmem [resolvable:$true] %s26
      %32 = dma.hbm_to_vmem [thread:$0]  %s3, 2048, %s27, [#allocation4], 64, 64, 4
    $region17: #{tpu_custom_call.1} parent=1 // pred_fallthru
      _
    // Predicated region
    $region18: #{tpu_custom_call.1} parent=1 // pred_check
      _
    $region19: #{tpu_custom_call.1} parent=1 // pred_check_branch
      %34 = sbr.rel (0) target = $region21
    $region20: #{tpu_custom_call.1} parent=1 // pred_region
      _
    $region21: #{tpu_custom_call.1} parent=1 // pred_fallthru
      _
    // Predicated region
    $region22: #{tpu_custom_call.1} parent=1 // pred_check
      _
    $region23: #{tpu_custom_call.1} parent=1 // pred_check_branch
      %36 = sbr.rel (0) target = $region25
    $region24: #{tpu_custom_call.1} parent=1 // pred_region
      _
    $region25: #{tpu_custom_call.1} parent=1 // pred_fallthru
      _
    // Predicated region
    $region26: #{tpu_custom_call.1} parent=1 // pred_check
      _
    $region27: #{tpu_custom_call.1} parent=1 // pred_check_branch
      %38 = sbr.rel (0) target = $region29
    $region28: #{tpu_custom_call.1} parent=1 // pred_region
      _
    $region29: #{tpu_custom_call.1} parent=1 // pred_fallthru
      _
    // Predicated region
    $region30: #{tpu_custom_call.1} parent=1 // pred_check
      _
    $region31: #{tpu_custom_call.1} parent=1 // pred_check_branch
      %40 = sbr.rel (0) target = $region33
    $region32: #{tpu_custom_call.1} parent=1 // pred_region
      %41 = dma.done [#allocation4], 2048
    $region33: #{tpu_custom_call.1} parent=1 // pred_fallthru
      _
    %v43 = vld [vmem:[%s0] sm:$0xf]
    %v44 = vld [vmem:[%s0 + $0x4] sm:$0xf]
    %v45 = vld [vmem:[%s0 + $0x8] sm:$0xf]
    %v46 = vld [vmem:[%s0 + $0xc] sm:$0xf]
    %v47 = vld [vmem:[%s0 + $0x10] sm:$0xf]
    %v48 = vld [vmem:[%s0 + $0x14] sm:$0xf]
    %v49 = vld [vmem:[%s0 + $0x18] sm:$0xf]
    %v50 = vld [vmem:[%s0 + $0x1c] sm:$0xf]
    %v51 = vld [vmem:[%s0 + $0x20] sm:$0xf]
    %v52 = vld [vmem:[%s0 + $0x24] sm:$0xf]
    %v53 = vld [vmem:[%s0 + $0x28] sm:$0xf]
    %v54 = vld [vmem:[%s0 + $0x2c] sm:$0xf]
    %v55 = vld [vmem:[%s0 + $0x30] sm:$0xf]
    %v56 = vld [vmem:[%s0 + $0x34] sm:$0xf]
    %v57 = vld [vmem:[%s0 + $0x38] sm:$0xf]
    %v58 = vld [vmem:[%s0 + $0x3c] sm:$0xf]
    %v59 = vld [vmem:[%s1] sm:$0xff]
    %v60 = vld [vmem:[%s1 + $0x8] sm:$0xff]
    %v61 = vld [vmem:[%s1 + $0x10] sm:$0xff]
    %v62 = vld [vmem:[%s1 + $0x18] sm:$0xff]
    %v63 = vld [vmem:[%s2] sm:$0x3]
    %v65 = vlaneseq
    %v66 = vshrl.u32 %v65, 7
    %v67 = vsub.s32 0, %v66
    %v68 = vrot.slane %v63, %v67
    %v69 = vlaneseq
    %v70 = vshrl.u32 %v69, 7
    %v71 = vsub.s32 1, %v70
    %v72 = vrot.slane %v63, %v71
    %v91 = vunpack.c.l.b16 %v43
    %v92 = vunpack.c.l.b16 %v44
    %v93 = vunpack.c.l.b16 %v45
    %v94 = vunpack.c.l.b16 %v46
    %v95 = vunpack.c.l.b16 %v47
    %v96 = vunpack.c.l.b16 %v48
    %v97 = vunpack.c.l.b16 %v49
    %v98 = vunpack.c.l.b16 %v50
    %v99 = vunpack.c.l.b16 %v51
    %v100 = vunpack.c.l.b16 %v52
    %v101 = vunpack.c.l.b16 %v53
    %v102 = vunpack.c.l.b16 %v54
    %v103 = vunpack.c.l.b16 %v55
    %v104 = vunpack.c.l.b16 %v56
    %v105 = vunpack.c.l.b16 %v57
    %v106 = vunpack.c.l.b16 %v58
    %v107 = vpack.c.b16 %v92, %v91
    %v108 = vpack.c.b16 %v94, %v93
    %v109 = vpack.c.b16 %v96, %v95
    %v110 = vpack.c.b16 %v98, %v97
    %v111 = vpack.c.b16 %v100, %v99
    %v112 = vpack.c.b16 %v102, %v101
    %v113 = vpack.c.b16 %v104, %v103
    %v114 = vpack.c.b16 %v106, %v105
    %v119 = vunpack.c.l.b16 %v59
    %v120 = vunpack.c.h.b16 %v59
    %v121 = vunpack.c.l.b16 %v60
    %v122 = vunpack.c.h.b16 %v60
    %v123 = vunpack.c.l.b16 %v61
    %v124 = vunpack.c.h.b16 %v61
    %v125 = vunpack.c.l.b16 %v62
    %v126 = vunpack.c.h.b16 %v62
    %v127 = vpack.c.b16 %v121, %v119
    %v128 = vpack.c.b16 %v122, %v120
    %v129 = vpack.c.b16 %v125, %v123
    %v130 = vpack.c.b16 %v126, %v124
    %vm135 = vcmask 261120
    %v137 = vsel %vm135, %v107, 0
    %v140 = vsel %vm135, %v108, 0
    %v143 = vsel %vm135, %v109, 0
    %v146 = vsel %vm135, %v110, 0
    %v149 = vsel %vm135, %v111, 0
    %v152 = vsel %vm135, %v112, 0
    %v155 = vsel %vm135, %v113, 0
    %v158 = vsel %vm135, %v114, 0
    %160 = vmatprep.subr.bf16.mxu0 %v128
    %161 = vmatpush1.bf16.msra.mxu0 %v127
    %162 = vmatprep.subr.bf16.mxu0 %v130
    %163 = vmatpush1.bf16.msra.mxu0 %v129
    %164 = vmatprep.subr.bf16.mxu0 0
    %165 = vmatpush1.bf16.msra.mxu0 0
    %166 = vmatprep.subr.bf16.mxu0 0
    %167 = vmatpush1.bf16.msra.mxu0 0
    %168 = vmatprep.subr.bf16.mxu0 0
    %169 = vmatpush1.bf16.msra.mxu0 0
    %170 = vmatprep.subr.bf16.mxu0 0
    %171 = vmatpush1.bf16.msra.mxu0 0
    %172 = vmatprep.subr.bf16.mxu0 0
    %173 = vmatpush1.bf16.msra.mxu0 0
    %174 = vmatprep.subr.bf16.mxu0 0
    %175 = vmatpush1.bf16.msra.mxu0 0
    %176 = vmatprep.subr.bf16.mxu0 0
    %177 = vmatpush1.bf16.msra.mxu0 0
    %178 = vmatprep.subr.bf16.mxu0 0
    %179 = vmatpush1.bf16.msra.mxu0 0
    %180 = vmatprep.subr.bf16.mxu0 0
    %181 = vmatpush1.bf16.msra.mxu0 0
    %182 = vmatprep.subr.bf16.mxu0 0
    %183 = vmatpush1.bf16.msra.mxu0 0
    %184 = vmatprep.subr.bf16.mxu0 0
    %185 = vmatpush1.bf16.msra.mxu0 0
    %186 = vmatprep.subr.bf16.mxu0 0
    %187 = vmatpush1.bf16.msra.mxu0 0
    %188 = vmatprep.subr.bf16.mxu0 0
    %189 = vmatpush1.bf16.msra.mxu0 0
    %190 = vmatprep.subr.bf16.mxu0 0
    %191 = vmatpush1.bf16.msra.mxu0 0
    %192 = vmatprep.mubr.bf16.mxu0 0
    %193 = vmatmul.mubr.bf16.gmra.mrb[0].mxu0 %v137
    %v194 = vpop.f32.mrb[0].mxu0
    %v195 = vadd.f32 %v68, %v194
    %v196 = vpop.f32.mrb[0].mxu0
    %v197 = vadd.f32 %v72, %v196
    %v198 = vpop.f32.mrb[0].mxu0
    %v199 = vadd.f32 %v68, %v198
    %v200 = vpop.f32.mrb[0].mxu0
    %v201 = vadd.f32 %v72, %v200
    %202 = vmatprep.mubr.bf16.mxu0 0
    %203 = vmatmul.mubr.bf16.gmra.mrb[0].mxu0 %v140
    %v204 = vpop.f32.mrb[0].mxu0
    %v205 = vadd.f32 %v68, %v204
    %v206 = vpop.f32.mrb[0].mxu0
    %v207 = vadd.f32 %v72, %v206
    %v208 = vpop.f32.mrb[0].mxu0
    %v209 = vadd.f32 %v68, %v208
    %v210 = vpop.f32.mrb[0].mxu0
    %v211 = vadd.f32 %v72, %v210
    %212 = vmatprep.mubr.bf16.mxu0 0
    %213 = vmatmul.mubr.bf16.gmra.mrb[0].mxu0 %v143
    %v214 = vpop.f32.mrb[0].mxu0
    %v215 = vadd.f32 %v68, %v214
    %v216 = vpop.f32.mrb[0].mxu0
    %v217 = vadd.f32 %v72, %v216
    %v218 = vpop.f32.mrb[0].mxu0
    %v219 = vadd.f32 %v68, %v218
    %v220 = vpop.f32.mrb[0].mxu0
    %v221 = vadd.f32 %v72, %v220
    %222 = vmatprep.mubr.bf16.mxu0 0
    %223 = vmatmul.mubr.bf16.gmra.mrb[0].mxu0 %v146
    %v224 = vpop.f32.mrb[0].mxu0
    %v225 = vadd.f32 %v68, %v224
    %v226 = vpop.f32.mrb[0].mxu0
    %v227 = vadd.f32 %v72, %v226
    %v228 = vpop.f32.mrb[0].mxu0
    %v229 = vadd.f32 %v68, %v228
    %v230 = vpop.f32.mrb[0].mxu0
    %v231 = vadd.f32 %v72, %v230
    %232 = vmatprep.mubr.bf16.mxu0 0
    %233 = vmatmul.mubr.bf16.gmra.mrb[0].mxu0 %v149
    %v234 = vpop.f32.mrb[0].mxu0
    %v235 = vadd.f32 %v68, %v234
    %v236 = vpop.f32.mrb[0].mxu0
    %v237 = vadd.f32 %v72, %v236
    %v238 = vpop.f32.mrb[0].mxu0
    %v239 = vadd.f32 %v68, %v238
    %v240 = vpop.f32.mrb[0].mxu0
    %v241 = vadd.f32 %v72, %v240
    %242 = vmatprep.mubr.bf16.mxu0 0
    %243 = vmatmul.mubr.bf16.gmra.mrb[0].mxu0 %v152
    %v244 = vpop.f32.mrb[0].mxu0
    %v245 = vadd.f32 %v68, %v244
    %v246 = vpop.f32.mrb[0].mxu0
    %v247 = vadd.f32 %v72, %v246
    %v248 = vpop.f32.mrb[0].mxu0
    %v249 = vadd.f32 %v68, %v248
    %v250 = vpop.f32.mrb[0].mxu0
    %v251 = vadd.f32 %v72, %v250
    %252 = vmatprep.mubr.bf16.mxu0 0
    %253 = vmatmul.mubr.bf16.gmra.mrb[0].mxu0 %v155
    %v254 = vpop.f32.mrb[0].mxu0
    %v255 = vadd.f32 %v68, %v254
    %v256 = vpop.f32.mrb[0].mxu0
    %v257 = vadd.f32 %v72, %v256
    %v258 = vpop.f32.mrb[0].mxu0
    %v259 = vadd.f32 %v68, %v258
    %v260 = vpop.f32.mrb[0].mxu0
    %v261 = vadd.f32 %v72, %v260
    %262 = vmatprep.mubr.bf16.mxu0 0
    %263 = vmatmul.mubr.bf16.gmra.mrb[0].mxu0 %v158
    %v264 = vpop.f32.mrb[0].mxu0
    %v265 = vadd.f32 %v68, %v264
    %v266 = vpop.f32.mrb[0].mxu0
    %v267 = vadd.f32 %v72, %v266
    %v268 = vpop.f32.mrb[0].mxu0
    %v269 = vadd.f32 %v68, %v268
    %v270 = vpop.f32.mrb[0].mxu0
    %v271 = vadd.f32 %v72, %v270
    %272 = vdwg.mxu0
    %v273 = vmax.f32 %v195, 0.0
    %v274 = vmax.f32 %v197, 0.0
    %v275 = vmax.f32 %v199, 0.0
    %v276 = vmax.f32 %v201, 0.0
    %v277 = vmax.f32 %v205, 0.0
    %v278 = vmax.f32 %v207, 0.0
    %v279 = vmax.f32 %v209, 0.0
    %v280 = vmax.f32 %v211, 0.0
    %v281 = vmax.f32 %v215, 0.0
    %v282 = vmax.f32 %v217, 0.0
    %v283 = vmax.f32 %v219, 0.0
    %v284 = vmax.f32 %v221, 0.0
    %v285 = vmax.f32 %v225, 0.0
    %v286 = vmax.f32 %v227, 0.0
    %v287 = vmax.f32 %v229, 0.0
    %v288 = vmax.f32 %v231, 0.0
    %v289 = vmax.f32 %v235, 0.0
    %v290 = vmax.f32 %v237, 0.0
    %v291 = vmax.f32 %v239, 0.0
    %v292 = vmax.f32 %v241, 0.0
    %v293 = vmax.f32 %v245, 0.0
    %v294 = vmax.f32 %v247, 0.0
    %v295 = vmax.f32 %v249, 0.0
    %v296 = vmax.f32 %v251, 0.0
    %v297 = vmax.f32 %v255, 0.0
    %v298 = vmax.f32 %v257, 0.0
    %v299 = vmax.f32 %v259, 0.0
    %v300 = vmax.f32 %v261, 0.0
    %v301 = vmax.f32 %v265, 0.0
    %v302 = vmax.f32 %v267, 0.0
    %v303 = vmax.f32 %v269, 0.0
    %v304 = vmax.f32 %v271, 0.0
    %v305 = vpack.c.bf16 %v275, %v273
    %v306 = vpack.c.bf16 %v276, %v274
    %v307 = vpack.c.bf16 %v279, %v277
    %v308 = vpack.c.bf16 %v280, %v278
    %v309 = vpack.c.bf16 %v283, %v281
    %v310 = vpack.c.bf16 %v284, %v282
    %v311 = vpack.c.bf16 %v287, %v285
    %v312 = vpack.c.bf16 %v288, %v286
    %v313 = vpack.c.bf16 %v291, %v289
    %v314 = vpack.c.bf16 %v292, %v290
    %v315 = vpack.c.bf16 %v295, %v293
    %v316 = vpack.c.bf16 %v296, %v294
    %v317 = vpack.c.bf16 %v299, %v297
    %v318 = vpack.c.bf16 %v300, %v298
    %v319 = vpack.c.bf16 %v303, %v301
    %v320 = vpack.c.bf16 %v304, %v302
    %v321 = vld [vmem:[#allocation3] sm:$0xf]
    %v322 = vld [vmem:[#allocation3 + $0x4] sm:$0xf]
    %v323 = vld [vmem:[#allocation3 + $0x8] sm:$0xf]
    %v324 = vld [vmem:[#allocation3 + $0xc] sm:$0xf]
    %v325 = vld [vmem:[#allocation3 + $0x10] sm:$0xf]
    %v326 = vld [vmem:[#allocation3 + $0x14] sm:$0xf]
    %v327 = vld [vmem:[#allocation3 + $0x18] sm:$0xf]
    %v328 = vld [vmem:[#allocation3 + $0x1c] sm:$0xf]
    %v329 = vld [vmem:[#allocation3 + $0x20] sm:$0xf]
    %v330 = vld [vmem:[#allocation3 + $0x24] sm:$0xf]
    %v331 = vld [vmem:[#allocation3 + $0x28] sm:$0xf]
    %v332 = vld [vmem:[#allocation3 + $0x2c] sm:$0xf]
    %v333 = vld [vmem:[#allocation3 + $0x30] sm:$0xf]
    %v334 = vld [vmem:[#allocation3 + $0x34] sm:$0xf]
    %v335 = vld [vmem:[#allocation3 + $0x38] sm:$0xf]
    %v336 = vld [vmem:[#allocation3 + $0x3c] sm:$0xf]
    %v337 = vld [vmem:[#allocation3 + $0x40] sm:$0xf]
    %v338 = vld [vmem:[#allocation3 + $0x44] sm:$0xf]
    %v339 = vld [vmem:[#allocation3 + $0x48] sm:$0xf]
    %v340 = vld [vmem:[#allocation3 + $0x4c] sm:$0xf]
    %v341 = vld [vmem:[#allocation3 + $0x50] sm:$0xf]
    %v342 = vld [vmem:[#allocation3 + $0x54] sm:$0xf]
    %v343 = vld [vmem:[#allocation3 + $0x58] sm:$0xf]
    %v344 = vld [vmem:[#allocation3 + $0x5c] sm:$0xf]
    %v345 = vld [vmem:[#allocation3 + $0x60] sm:$0xf]
    %v346 = vld [vmem:[#allocation3 + $0x64] sm:$0xf]
    %v347 = vld [vmem:[#allocation3 + $0x68] sm:$0xf]
    %v348 = vld [vmem:[#allocation3 + $0x6c] sm:$0xf]
    %v349 = vld [vmem:[#allocation3 + $0x70] sm:$0xf]
    %v350 = vld [vmem:[#allocation3 + $0x74] sm:$0xf]
    %v351 = vld [vmem:[#allocation3 + $0x78] sm:$0xf]
    %v352 = vld [vmem:[#allocation3 + $0x7c] sm:$0xf]
    %v353 = vld [vmem:[%s4] sm:$0x1]
    %v355 = vlaneseq
    %v356 = vshrl.u32 %v355, 7
    %v357 = vsub.s32 0, %v356
    %v358 = vrot.slane %v353, %v357
    %v392 = vunpack.c.l.b16 %v321
    %v393 = vunpack.c.l.b16 %v322
    %v394 = vunpack.c.l.b16 %v323
    %v395 = vunpack.c.l.b16 %v324
    %v396 = vunpack.c.l.b16 %v325
    %v397 = vunpack.c.l.b16 %v326
    %v398 = vunpack.c.l.b16 %v327
    %v399 = vunpack.c.l.b16 %v328
    %v400 = vunpack.c.l.b16 %v329
    %v401 = vunpack.c.l.b16 %v330
    %v402 = vunpack.c.l.b16 %v331
    %v403 = vunpack.c.l.b16 %v332
    %v404 = vunpack.c.l.b16 %v333
    %v405 = vunpack.c.l.b16 %v334
    %v406 = vunpack.c.l.b16 %v335
    %v407 = vunpack.c.l.b16 %v336
    %v408 = vunpack.c.l.b16 %v337
    %v409 = vunpack.c.l.b16 %v338
    %v410 = vunpack.c.l.b16 %v339
    %v411 = vunpack.c.l.b16 %v340
    %v412 = vunpack.c.l.b16 %v341
    %v413 = vunpack.c.l.b16 %v342
    %v414 = vunpack.c.l.b16 %v343
    %v415 = vunpack.c.l.b16 %v344
    %v416 = vunpack.c.l.b16 %v345
    %v417 = vunpack.c.l.b16 %v346
    %v418 = vunpack.c.l.b16 %v347
    %v419 = vunpack.c.l.b16 %v348
    %v420 = vunpack.c.l.b16 %v349
    %v421 = vunpack.c.l.b16 %v350
    %v422 = vunpack.c.l.b16 %v351
    %v423 = vunpack.c.l.b16 %v352
    %v424 = vpack.c.b16 %v393, %v392
    %v425 = vpack.c.b16 %v395, %v394
    %v426 = vpack.c.b16 %v397, %v396
    %v427 = vpack.c.b16 %v399, %v398
    %v428 = vpack.c.b16 %v401, %v400
    %v429 = vpack.c.b16 %v403, %v402
    %v430 = vpack.c.b16 %v405, %v404
    %v431 = vpack.c.b16 %v407, %v406
    %v432 = vpack.c.b16 %v409, %v408
    %v433 = vpack.c.b16 %v411, %v410
    %v434 = vpack.c.b16 %v413, %v412
    %v435 = vpack.c.b16 %v415, %v414
    %v436 = vpack.c.b16 %v417, %v416
    %v437 = vpack.c.b16 %v419, %v418
    %v438 = vpack.c.b16 %v421, %v420
    %v439 = vpack.c.b16 %v423, %v422
    %456 = vmatprep.subr.bf16.mxu0 0
    %457 = vmatpush1.bf16.msra.mxu0 %v424
    %458 = vmatprep.subr.bf16.mxu0 0
    %459 = vmatpush1.bf16.msra.mxu0 %v425
    %460 = vmatprep.subr.bf16.mxu0 0
    %461 = vmatpush1.bf16.msra.mxu0 %v426
    %462 = vmatprep.subr.bf16.mxu0 0
    %463 = vmatpush1.bf16.msra.mxu0 %v427
    %464 = vmatprep.subr.bf16.mxu0 0
    %465 = vmatpush1.bf16.msra.mxu0 %v428
    %466 = vmatprep.subr.bf16.mxu0 0
    %467 = vmatpush1.bf16.msra.mxu0 %v429
    %468 = vmatprep.subr.bf16.mxu0 0
    %469 = vmatpush1.bf16.msra.mxu0 %v430
    %470 = vmatprep.subr.bf16.mxu0 0
    %471 = vmatpush1.bf16.msra.mxu0 %v431
    %472 = vmatprep.subr.bf16.mxu0 0
    %473 = vmatpush1.bf16.msra.mxu0 %v432
    %474 = vmatprep.subr.bf16.mxu0 0
    %475 = vmatpush1.bf16.msra.mxu0 %v433
    %476 = vmatprep.subr.bf16.mxu0 0
    %477 = vmatpush1.bf16.msra.mxu0 %v434
    %478 = vmatprep.subr.bf16.mxu0 0
    %479 = vmatpush1.bf16.msra.mxu0 %v435
    %480 = vmatprep.subr.bf16.mxu0 0
    %481 = vmatpush1.bf16.msra.mxu0 %v436
    %482 = vmatprep.subr.bf16.mxu0 0
    %483 = vmatpush1.bf16.msra.mxu0 %v437
    %484 = vmatprep.subr.bf16.mxu0 0
    %485 = vmatpush1.bf16.msra.mxu0 %v438
    %486 = vmatprep.subr.bf16.mxu0 0
    %487 = vmatpush1.bf16.msra.mxu0 %v439
    %488 = vmatprep.mubr.bf16.mxu0 %v306
    %489 = vmatmul.mubr.bf16.gmra.mrb[0].mxu0 %v305
    %v490 = vpop.f32.mrb[0].mxu0
    %v491 = vadd.f32 %v358, %v490
    %v492 = vpop.f32.mrb[0].mxu0
    %v493 = vpop.f32.mrb[0].mxu0
    %v494 = vadd.f32 %v358, %v493
    %v495 = vpop.f32.mrb[0].mxu0
    %496 = vmatprep.mubr.bf16.mxu0 %v308
    %497 = vmatmul.mubr.bf16.gmra.mrb[0].mxu0 %v307
    %v498 = vpop.f32.mrb[0].mxu0
    %v499 = vadd.f32 %v358, %v498
    %v500 = vpop.f32.mrb[0].mxu0
    %v501 = vpop.f32.mrb[0].mxu0
    %v502 = vadd.f32 %v358, %v501
    %v503 = vpop.f32.mrb[0].mxu0
    %504 = vmatprep.mubr.bf16.mxu0 %v310
    %505 = vmatmul.mubr.bf16.gmra.mrb[0].mxu0 %v309
    %v506 = vpop.f32.mrb[0].mxu0
    %v507 = vadd.f32 %v358, %v506
    %v508 = vpop.f32.mrb[0].mxu0
    %v509 = vpop.f32.mrb[0].mxu0
    %v510 = vadd.f32 %v358, %v509
    %v511 = vpop.f32.mrb[0].mxu0
    %512 = vmatprep.mubr.bf16.mxu0 %v312
    %513 = vmatmul.mubr.bf16.gmra.mrb[0].mxu0 %v311
    %v514 = vpop.f32.mrb[0].mxu0
    %v515 = vadd.f32 %v358, %v514
    %v516 = vpop.f32.mrb[0].mxu0
    %v517 = vpop.f32.mrb[0].mxu0
    %v518 = vadd.f32 %v358, %v517
    %v519 = vpop.f32.mrb[0].mxu0
    %520 = vmatprep.mubr.bf16.mxu0 %v314
    %521 = vmatmul.mubr.bf16.gmra.mrb[0].mxu0 %v313
    %v522 = vpop.f32.mrb[0].mxu0
    %v523 = vadd.f32 %v358, %v522
    %v524 = vpop.f32.mrb[0].mxu0
    %v525 = vpop.f32.mrb[0].mxu0
    %v526 = vadd.f32 %v358, %v525
    %v527 = vpop.f32.mrb[0].mxu0
    %528 = vmatprep.mubr.bf16.mxu0 %v316
    %529 = vmatmul.mubr.bf16.gmra.mrb[0].mxu0 %v315
    %v530 = vpop.f32.mrb[0].mxu0
    %v531 = vadd.f32 %v358, %v530
    %v532 = vpop.f32.mrb[0].mxu0
    %v533 = vpop.f32.mrb[0].mxu0
    %v534 = vadd.f32 %v358, %v533
    %v535 = vpop.f32.mrb[0].mxu0
    %536 = vmatprep.mubr.bf16.mxu0 %v318
    %537 = vmatmul.mubr.bf16.gmra.mrb[0].mxu0 %v317
    %v538 = vpop.f32.mrb[0].mxu0
    %v539 = vadd.f32 %v358, %v538
    %v540 = vpop.f32.mrb[0].mxu0
    %v541 = vpop.f32.mrb[0].mxu0
    %v542 = vadd.f32 %v358, %v541
    %v543 = vpop.f32.mrb[0].mxu0
    %544 = vmatprep.mubr.bf16.mxu0 %v320
    %545 = vmatmul.mubr.bf16.gmra.mrb[0].mxu0 %v319
    %v546 = vpop.f32.mrb[0].mxu0
    %v547 = vadd.f32 %v358, %v546
    %v548 = vpop.f32.mrb[0].mxu0
    %v549 = vpop.f32.mrb[0].mxu0
    %v550 = vadd.f32 %v358, %v549
    %v551 = vpop.f32.mrb[0].mxu0
    %552 = vdwg.mxu0
    %v553 = vmax.f32 %v491, 0.0
    %v554 = vmax.f32 %v494, 0.0
    %v555 = vmax.f32 %v499, 0.0
    %v556 = vmax.f32 %v502, 0.0
    %v557 = vmax.f32 %v507, 0.0
    %v558 = vmax.f32 %v510, 0.0
    %v559 = vmax.f32 %v515, 0.0
    %v560 = vmax.f32 %v518, 0.0
    %v561 = vmax.f32 %v523, 0.0
    %v562 = vmax.f32 %v526, 0.0
    %v563 = vmax.f32 %v531, 0.0
    %v564 = vmax.f32 %v534, 0.0
    %v565 = vmax.f32 %v539, 0.0
    %v566 = vmax.f32 %v542, 0.0
    %v567 = vmax.f32 %v547, 0.0
    %v568 = vmax.f32 %v550, 0.0
    %v569 = vld [vmem:[%s5] sm:$0x1]
    %s570 = sld [smem:[#allocation2]]
    %v571 = vstv %s570
    %572 = vmatprep.subr.mxu0 0.0
    %573 = vmatpush1.xpose.msra.mxu0 %v553
    %574 = vmatprep.subr.mxu0 0.0
    %575 = vmatpush1.xpose.msra.mxu0 %v554
    %576 = vmatprep.subr.mxu0 0.0
    %577 = vmatpush1.xpose.msra.mxu0 %v555
    %578 = vmatprep.subr.mxu0 0.0
    %579 = vmatpush1.xpose.msra.mxu0 %v556
    %580 = vmatprep.subr.mxu0 0.0
    %581 = vmatpush1.xpose.msra.mxu0 %v557
    %582 = vmatprep.subr.mxu0 0.0
    %583 = vmatpush1.xpose.msra.mxu0 %v558
    %584 = vmatprep.subr.mxu0 0.0
    %585 = vmatpush1.xpose.msra.mxu0 %v559
    %586 = vmatprep.subr.mxu0 0.0
    %587 = vmatpush1.xpose.msra.mxu0 %v560
    %588 = vmatprep.subr.mxu0 0.0
    %589 = vmatpush1.xpose.msra.mxu0 %v561
    %590 = vmatprep.subr.mxu0 0.0
    %591 = vmatpush1.xpose.msra.mxu0 %v562
    %592 = vmatprep.subr.mxu0 0.0
    %593 = vmatpush1.xpose.msra.mxu0 %v563
    %594 = vmatprep.subr.mxu0 0.0
    %595 = vmatpush1.xpose.msra.mxu0 %v564
    %596 = vmatprep.subr.mxu0 0.0
    %597 = vmatpush1.xpose.msra.mxu0 %v565
    %598 = vmatprep.subr.mxu0 0.0
    %599 = vmatpush1.xpose.msra.mxu0 %v566
    %600 = vmatprep.subr.mxu0 0.0
    %601 = vmatpush1.xpose.msra.mxu0 %v567
    %602 = vmatprep.subr.mxu0 0.0
    %603 = vmatpush1.xpose.msra.mxu0 %v568
    %604 = vmatprep.subr.mxu0 0.0
    %605 = vmatpush1.xpose.msra.mxu0 0.0
    %606 = vmatprep.subr.mxu0 0.0
    %607 = vmatpush1.xpose.msra.mxu0 0.0
    %608 = vmatprep.subr.mxu0 0.0
    %609 = vmatpush1.xpose.msra.mxu0 0.0
    %610 = vmatprep.subr.mxu0 0.0
    %611 = vmatpush1.xpose.msra.mxu0 0.0
    %612 = vmatprep.subr.mxu0 0.0
    %613 = vmatpush1.xpose.msra.mxu0 0.0
    %614 = vmatprep.subr.mxu0 0.0
    %615 = vmatpush1.xpose.msra.mxu0 0.0
    %616 = vmatprep.subr.mxu0 0.0
    %617 = vmatpush1.xpose.msra.mxu0 0.0
    %618 = vmatprep.subr.mxu0 0.0
    %619 = vmatpush1.xpose.msra.mxu0 0.0
    %620 = vmatprep.subr.mxu0 0.0
    %621 = vmatpush1.xpose.msra.mxu0 0.0
    %622 = vmatprep.subr.mxu0 0.0
    %623 = vmatpush1.xpose.msra.mxu0 0.0
    %624 = vmatprep.subr.mxu0 0.0
    %625 = vmatpush1.xpose.msra.mxu0 0.0
    %626 = vmatprep.subr.mxu0 0.0
    %627 = vmatpush1.xpose.msra.mxu0 0.0
    %628 = vmatprep.subr.mxu0 0.0
    %629 = vmatpush1.xpose.msra.mxu0 0.0
    %630 = vmatprep.subr.mxu0 0.0
    %631 = vmatpush1.xpose.msra.mxu0 0.0
    %632 = vmatprep.subr.mxu0 0.0
    %633 = vmatpush1.xpose.msra.mxu0 0.0
    %634 = vmatprep.subr.mxu0 0.0
    %635 = vmatpush1.xpose.msra.mxu0 0.0
    %636 = vmatprep.mubr.f32.mxu0 0.0
    %637 = vmatmul.mubr.f32.gmra.mrb[0].mxu0 %v569
    %v638 = vpop.f32.mrb[0].mxu0
    %v639 = vadd.f32 %v571, %v638
    %v640 = vpop.f32.mrb[0].mxu0
    %641 = vdwg.mxu0
    %642 = vst [vmem:[#allocation6] sm:$0x1] %v639
    // Predicated region
    $region34: #{tpu_custom_call.1} parent=1 // pred_check
      _
    $region35: #{tpu_custom_call.1} parent=1 // pred_check_branch
      %644 = sbr.rel (0) target = $region37
    $region36: #{tpu_custom_call.1} parent=1 // pred_region
      %s646 = ssub.s32 16, 16
      %647 = vsyncadd [#allocation5], %s646
      %s649 = sshll.u32 [#allocation6], 4
      %s650 = int_to_ptr.vmem [resolvable:$true] %s649
      %652 = dma.vmem_to_hbm [thread:$0]  %s650, 16, %s7, [#allocation5]
    $region37: #{tpu_custom_call.1} parent=1 // pred_fallthru
      _
    // Predicated region
    $region38: #{tpu_custom_call.1} parent=1 // pred_check
      _
    $region39: #{tpu_custom_call.1} parent=1 // pred_check_branch
      %654 = sbr.rel (0) target = $region41
    $region40: #{tpu_custom_call.1} parent=1 // pred_region
      %655 = dma.done [#allocation5], 16
    $region41: #{tpu_custom_call.1} parent=1 // pred_fallthru
      _
    %656 = vsyncpa [#allocation4], 1
    %657 = vsyncpa [#allocation5], 1

</llo_original>
